<compile_context>
chip_gen: v7x
topology: tpu7x:2x2x1
jax: 0.10.0
libtpu: 0.0.40
codegen_flags: <defaults>
</compile_context>

<pallas_src>
import jax
import jax.numpy as jnp
import numpy as np
from jax.experimental import pallas as pl
from jax.experimental.pallas import tpu as pltpu


def _obsnet_kernel(x_ref,
                   w1_ref, b1_ref,
                   w2_ref, b2_ref,
                   w31_ref, b31_ref,
                   wf2_ref, bf2_ref,
                   o_ref,
                   acc_ref):
    """Grid = (batch tiles ["parallel"], N tiles ["arbitrary"])."""
    k = pl.program_id(1)

    @pl.when(k == 0)
    def _():
        acc_ref[...] = jnp.zeros_like(acc_ref)

    TB, NT, Cp = x_ref.shape
    cdt = w1_ref.dtype                      # matmul compute dtype (bf16)

    # (TB, NT, Cp) -> (TB*NT, Cp): NT is a multiple of 8 (or == N), so merging
    # the leading dims is layout-free -> one big-M MXU tile per layer.
    x = x_ref[...].reshape(TB * NT, Cp)

    # conv1 (1x1) -> ReLU            (bn1 is folded into conv2's weights)
    h = jnp.dot(x, w1_ref[...], preferred_element_type=jnp.float32) + b1_ref[...]
    h = jnp.maximum(h, 0.0).astype(cdt)     # single bf16 materialization

    # conv2 (1x1, bn1-folded) -> ReLU   (bn2, bn3, conv3 act after the pool)
    h = jnp.dot(h, w2_ref[...], preferred_element_type=jnp.float32) + b2_ref[...]
    h = jnp.maximum(h, 0.0)                 # keep f32 for the pooled sum

    # Partial global sum pool over this N tile (f32 VMEM accumulator).
    d1 = h.shape[-1]
    acc_ref[...] += jnp.sum(h.reshape(TB, NT, d1), axis=1)

    # Finalize on the last N tile: conv3(+bn2,bn3), commuted past the linear
    # pool, has been folded with fc1 into a single (d1, d2) matmul (w31, b31).
    @pl.when(k == pl.num_programs(1) - 1)
    def _():
        s = acc_ref[...]
        f = jnp.dot(s.astype(cdt), w31_ref[...],
                    preferred_element_type=jnp.float32) + b31_ref[...]
        f = jnp.maximum(f, 0.0)             # ReLU; Dropout == identity (eval)
        f = jnp.dot(f.astype(cdt), wf2_ref[...],
                    preferred_element_type=jnp.float32) + bf2_ref[...]
        # F.normalize (L2, eps=1e-12): f * rsqrt(max(||f||^2, 1e-24)).
        ssq = jnp.sum(f * f, axis=1, keepdims=True)
        o_ref[...] = (f * jax.lax.rsqrt(jnp.maximum(ssq, 1e-24))).astype(o_ref.dtype)


def fold_obs_net_params(params, n_points, compute_dtype=jnp.bfloat16, pad_c_to=8):
    """Fold eval-mode BN affines + post-pool conv3 into adjacent weights.

    Returns kernel params (w1, b1, w2f, b2f, w31, b31, wf2, bf2).
    Weights are cast to `compute_dtype`; biases stay f32.  `n_points` (N) is
    needed because the pooled-path bias picks up a factor of N.
    """
    (w1, b1, s1, t1, w2, b2, s2, t2, w3, b3, s3, t3,
     wf1, bf1, wf2, bf2) = params

    C = w1.shape[0]
    Cp = ((C + pad_c_to - 1) // pad_c_to) * pad_c_to
    w1p = jnp.pad(w1, ((0, Cp - C), (0, 0)))

    # bn1 sits after relu(conv1), so it folds into conv2's input side:
    #   (h*s1 + t1) @ w2 + b2 == h @ (diag(s1) @ w2) + (t1 @ w2 + b2)
    w2f = w2 * s1.reshape(-1, 1)
    b2f = t1 @ w2 + b2

    # bn2 folds into conv3's input side; bn3 (no ReLU before it) is a
    # per-output-column scale/shift of conv3:
    #   per point: h @ (diag(s2) @ w3 * s3) + ((t2 @ w3 + b3) * s3 + t3)
    w3f = (w3 * s2.reshape(-1, 1)) * s3
    b3f = (t2 @ w3 + b3) * s3 + t3

    # conv3 commutes past the (linear) sum pool and then folds into fc1:
    #   sum_N(h @ w3f + b3f) @ wf1 + bf1
    #     == (sum_N h) @ (w3f @ wf1) + (N * b3f) @ wf1 + bf1
    w31 = w3f @ wf1
    b31 = (float(n_points) * b3f) @ wf1 + bf1

    cast_w = lambda w: w.astype(compute_dtype)
    f32 = lambda b: b.astype(jnp.float32)
    return (cast_w(w1p), f32(b1),
            cast_w(w2f), f32(b2f),
            cast_w(w31), f32(b31),
            cast_w(wf2), f32(bf2))


def _pick_tiles(B, N, target_m=2048):
    """Choose (TB, NT) batch / point tile sizes.

    * TB: multiple of 8 and <= B/2 when B >= 16, so the "parallel" batch axis
      has >= 2 grid steps (v7x has 2 TensorCores); otherwise the whole batch.
    * NT: a divisor of N that is a multiple of 8 (layout-free in-kernel merge)
      sized so the per-step MXU M dim TB*NT lands near `target_m` — amortizes
      v6e/v7x 256x256 MXU fill/drain while keeping VMEM tiny
      (TB*NT = 2048 -> ~1 MiB bf16 x block + ~2 MiB f32 intermediates, far
      below the v5e 16 MiB scoped default and v7x 64 MiB physical VMEM).
    """
    if B >= 16:
        TB = max(8, min(128, ((B // 2) // 8) * 8))
    else:
        TB = B                      # degenerate small batch: single step
    if N <= 8 or N % 8 != 0:
        NT = N                      # TODO(synk): mask partial N tiles instead
    else:
        cap = max(8, min(N, (target_m // max(TB, 1)) // 8 * 8))
        NT = 8
        for cand in range(cap, 7, -8):
            if N % cand == 0:
                NT = cand
                break
    return TB, NT


def obs_net_forward(x, kparams):
    """x: (B, N, C) float32; kparams from fold_obs_net_params.

    Returns (B, d2) float32 L2-normalized features.
    """
    B, N, C = x.shape
    (w1, b1, w2, b2, w31, b31, wf2, bf2) = kparams
    Cp = w1.shape[0]
    d1 = w2.shape[1]
    d2 = wf2.shape[1]

    if Cp != C:
        x = jnp.pad(x, ((0, 0), (0, 0), (0, Cp - C)))
    # bf16 activations into the kernel: halves the HBM input stream and the
    # lane-padded VMEM x block; the matmuls already consume bf16 operands.
    x = x.astype(w1.dtype)

    TB, NT = _pick_tiles(B, N)
    grid = (pl.cdiv(B, TB), pl.cdiv(N, NT))

    param_spec = lambda p: pl.BlockSpec(p.shape, lambda b, k: (0, 0))
    in_specs = [pl.BlockSpec((TB, NT, Cp), lambda b, k: (b, k, 0))]
    in_specs += [param_spec(p) for p in kparams]
    out_spec = pl.BlockSpec((TB, d2), lambda b, k: (b, 0))  # lane-dense, resident over k

    return pl.pallas_call(
        _obsnet_kernel,
        out_shape=jax.ShapeDtypeStruct((B, d2), jnp.float32),
        grid_spec=pltpu.PrefetchScalarGridSpec(
            num_scalar_prefetch=0,
            grid=grid,
            in_specs=in_specs,
            out_specs=out_spec,
            scratch_shapes=[pltpu.VMEM((TB, d1), jnp.float32)],
        ),
        compiler_params=pltpu.CompilerParams(
            dimension_semantics=("parallel", "arbitrary"),
            vmem_limit_bytes=32 * 1024 * 1024),
    )(x, *kparams)


def obs_net_ref(x, params):
    """Pure-JAX reference of the same (eval-mode) forward pass, f32 throughout.

    Matches the PyTorch module: ReLU *before* BatchNorm for conv1/conv2,
    bn3 directly on conv3, sum pool over N, fc head, F.normalize.
    """
    (w1, b1, s1, t1, w2, b2, s2, t2, w3, b3, s3, t3,
     wf1, bf1, wf2, bf2) = params
    h = jax.nn.relu(x @ w1 + b1) * s1 + t1
    h = jax.nn.relu(h @ w2 + b2) * s2 + t2
    h = (h @ w3 + b3) * s3 + t3
    s = jnp.sum(h, axis=1)                                           # (B, d2)
    f = jax.nn.relu(s @ wf1 + bf1) @ wf2 + bf2
    n = jnp.sqrt(jnp.sum(f * f, axis=1, keepdims=True))
    return f / jnp.maximum(n, 1e-12)


def init_params(key, channel, dims):
    """Deterministic synthetic parameters (shapes follow ObsNet.__init__)."""
    d0, d1, d2 = dims
    eps = 1e-5
    ks = jax.random.split(key, 22)

    def u(k, shape, scale=0.1):
        return jax.random.uniform(k, shape, jnp.float32, -scale, scale)

    # 1x1 conv weights stored transposed as (in, out) for right-matmul.
    w1, b1 = u(ks[0], (channel, d0)), u(ks[1], (1, d0))
    w2, b2 = u(ks[2], (d0, d1)),      u(ks[3], (1, d1))
    w3, b3 = u(ks[4], (d1, d2)),      u(ks[5], (1, d2))

    def bn_fold(kg, kb, km, kv, dim):
        gamma = 1.0 + u(kg, (1, dim))
        beta = u(kb, (1, dim))
        running_mean = u(km, (1, dim))
        running_var = 1.0 + jnp.abs(u(kv, (1, dim)))
        scale = gamma / jnp.sqrt(running_var + eps)
        shift = beta - running_mean * scale
        return scale, shift

    s1, t1 = bn_fold(ks[6], ks[7], ks[8], ks[9], d0)
    s2, t2 = bn_fold(ks[10], ks[11], ks[12], ks[13], d1)
    s3, t3 = bn_fold(ks[14], ks[15], ks[16], ks[17], d2)

    # fc head: Linear(d2, d2) -> ReLU -> Dropout -> Linear(d2, d2)
    wf1, bf1 = u(ks[18], (d2, d2)), u(ks[19], (1, d2))
    wf2, bf2 = u(ks[20], (d2, d2)), u(ks[21], (1, d2))

    return (w1, b1, s1, t1, w2, b2, s2, t2, w3, b3, s3, t3,
            wf1, bf1, wf2, bf2)


if __name__ == "__main__":
    # Small shapes consistent with the module: batch=2, N=8 points,
    # channel=4 (input feature dim D == Conv1d in-channels), dims=[128]*3.
    B, N, channel = 2, 8, 4
    dims = [128, 128, 128]

    key = jax.random.PRNGKey(0)
    kx, kp = jax.random.split(key)
    x = jax.random.normal(kx, (B, N, channel), dtype=jnp.float32)
    params = init_params(kp, channel, dims)

    # One-time parameter prep: BN folding, pool/conv3 commute + conv3-into-fc1
    # fold, C padding, bf16 cast of weights.
    kparams = fold_obs_net_params(params, n_points=N,
                                  compute_dtype=jnp.bfloat16)

    out = obs_net_forward(x, kparams)
    out = jax.block_until_ready(out)

    ref = obs_net_ref(x, params)
    assert out.shape == (B, dims[2])
    # bf16 matmul operands with f32 accumulation -> slightly loosened tolerance.
    np.testing.assert_allclose(np.asarray(out), np.asarray(ref),
                               atol=2e-2, rtol=2e-2)
    print("KERNEL_OK")
</pallas_src>

<mosaic_0001>
module attributes {stable_mosaic.version = 11 : i64} {
  func.func @_obsnet_kernel(%arg0: i32, %arg1: i32, %arg2: memref<2x8x8xbf16, #tpu.memory_space<vmem>>, %arg3: memref<8x128xbf16, #tpu.memory_space<vmem>>, %arg4: memref<1x128xf32, #tpu.memory_space<vmem>>, %arg5: memref<128x128xbf16, #tpu.memory_space<vmem>>, %arg6: memref<1x128xf32, #tpu.memory_space<vmem>>, %arg7: memref<128x128xbf16, #tpu.memory_space<vmem>>, %arg8: memref<1x128xf32, #tpu.memory_space<vmem>>, %arg9: memref<128x128xbf16, #tpu.memory_space<vmem>>, %arg10: memref<1x128xf32, #tpu.memory_space<vmem>>, %arg11: memref<2x128xf32, #tpu.memory_space<vmem>>, %arg12: memref<2x128xf32, #tpu.memory_space<vmem>>) attributes {dimension_semantics = [#tpu.dimension_semantics<parallel>, #tpu.dimension_semantics<arbitrary>], iteration_bounds = array<i64: 1, 1>, scalar_prefetch = 0 : i64, scratch_operands = 1 : i64, tpu.core_type = #tpu.core_type<tc>, window_params = [{transform_indices = @transform_0, window_bounds = array<i64: 2, 8, 8>}, {pipeline_mode = #tpu.pipeline_mode<synchronous>, transform_indices = @transform_1, window_bounds = array<i64: 8, 128>}, {pipeline_mode = #tpu.pipeline_mode<synchronous>, transform_indices = @transform_2, window_bounds = array<i64: 1, 128>}, {pipeline_mode = #tpu.pipeline_mode<synchronous>, transform_indices = @transform_3, window_bounds = array<i64: 128, 128>}, {pipeline_mode = #tpu.pipeline_mode<synchronous>, transform_indices = @transform_4, window_bounds = array<i64: 1, 128>}, {pipeline_mode = #tpu.pipeline_mode<synchronous>, transform_indices = @transform_5, window_bounds = array<i64: 128, 128>}, {pipeline_mode = #tpu.pipeline_mode<synchronous>, transform_indices = @transform_6, window_bounds = array<i64: 1, 128>}, {pipeline_mode = #tpu.pipeline_mode<synchronous>, transform_indices = @transform_7, window_bounds = array<i64: 128, 128>}, {pipeline_mode = #tpu.pipeline_mode<synchronous>, transform_indices = @transform_8, window_bounds = array<i64: 1, 128>}, {transform_indices = @transform_9, window_bounds = array<i64: 2, 128>}]} {
    %c0_i32 = arith.constant 0 : i32
    %0 = arith.cmpi eq, %arg1, %c0_i32 : i32
    %1 = arith.extui %0 : i1 to i32
    %c0_i32_0 = arith.constant 0 : i32
    %2 = arith.cmpi ne, %1, %c0_i32_0 : i32
    scf.if %2 {
      %cst_21 = arith.constant 0.000000e+00 : f32
      %28 = vector.broadcast %cst_21 : f32 to vector<2x128xf32>
      %c0_22 = arith.constant 0 : index
      %c0_23 = arith.constant 0 : index
      %29 = vector.load %arg12[%c0_22, %c0_23] : memref<2x128xf32, #tpu.memory_space<vmem>>, vector<2x128xf32>
      tpu.vector_store %arg12[%c0_22, %c0_23], %28 {strides = array<i32>} : memref<2x128xf32, #tpu.memory_space<vmem>>, vector<2x128xf32>,
    } else {
    }
    %c0 = arith.constant 0 : index
    %c0_1 = arith.constant 0 : index
    %c0_2 = arith.constant 0 : index
    %3 = vector.load %arg2[%c0, %c0_1, %c0_2] : memref<2x8x8xbf16, #tpu.memory_space<vmem>>, vector<2x8x8xbf16>
    %4 = vector.shape_cast %3 : vector<2x8x8xbf16> to vector<16x8xbf16>
    %c0_3 = arith.constant 0 : index
    %c0_4 = arith.constant 0 : index
    %5 = vector.load %arg3[%c0_3, %c0_4] : memref<8x128xbf16, #tpu.memory_space<vmem>>, vector<8x128xbf16>
    %cst = arith.constant dense<0.000000e+00> : vector<16x128xf32>
    %6 = tpu.matmul %4, %5, %cst {dimension_numbers = #tpu.dot_dimension_numbers<[1], [0], [0], [1], [0, 0, 1, 1], [], []>} : vector<16x8xbf16>, vector<8x128xbf16>, vector<16x128xf32> -> vector<16x128xf32>
    %c0_5 = arith.constant 0 : index
    %c0_6 = arith.constant 0 : index
    %7 = vector.load %arg4[%c0_5, %c0_6] : memref<1x128xf32, #tpu.memory_space<vmem>>, vector<1x128xf32>
    %8 = vector.broadcast %7 : vector<1x128xf32> to vector<16x128xf32>
    %9 = arith.addf %6, %8 : vector<16x128xf32>
    %cst_7 = arith.constant 0.000000e+00 : f32
    %10 = vector.broadcast %cst_7 : f32 to vector<16x128xf32>
    %11 = arith.maximumf %9, %10 : vector<16x128xf32>
    %12 = arith.truncf %11 : vector<16x128xf32> to vector<16x128xbf16>
    %c0_8 = arith.constant 0 : index
    %c0_9 = arith.constant 0 : index
    %13 = vector.load %arg5[%c0_8, %c0_9] : memref<128x128xbf16, #tpu.memory_space<vmem>>, vector<128x128xbf16>
    %cst_10 = arith.constant dense<0.000000e+00> : vector<16x128xf32>
    %14 = tpu.matmul %12, %13, %cst_10 {dimension_numbers = #tpu.dot_dimension_numbers<[1], [0], [0], [1], [0, 0, 1, 1], [], []>} : vector<16x128xbf16>, vector<128x128xbf16>, vector<16x128xf32> -> vector<16x128xf32>
    %c0_11 = arith.constant 0 : index
    %c0_12 = arith.constant 0 : index
    %15 = vector.load %arg6[%c0_11, %c0_12] : memref<1x128xf32, #tpu.memory_space<vmem>>, vector<1x128xf32>
    %16 = vector.broadcast %15 : vector<1x128xf32> to vector<16x128xf32>
    %17 = arith.addf %14, %16 : vector<16x128xf32>
    %cst_13 = arith.constant 0.000000e+00 : f32
    %18 = vector.broadcast %cst_13 : f32 to vector<16x128xf32>
    %19 = arith.maximumf %17, %18 : vector<16x128xf32>
    %c0_14 = arith.constant 0 : index
    %c0_15 = arith.constant 0 : index
    %20 = vector.load %arg12[%c0_14, %c0_15] : memref<2x128xf32, #tpu.memory_space<vmem>>, vector<2x128xf32>
    %21 = vector.shape_cast %19 : vector<16x128xf32> to vector<2x8x128xf32>
    %cst_16 = arith.constant dense<0.000000e+00> : vector<2x128xf32>
    %22 = vector.multi_reduction <add>, %21, %cst_16 [1] : vector<2x8x128xf32> to vector<2x128xf32>
    %23 = arith.addf %20, %22 : vector<2x128xf32>
    %c0_17 = arith.constant 0 : index
    %c0_18 = arith.constant 0 : index
    %24 = vector.load %arg12[%c0_17, %c0_18] : memref<2x128xf32, #tpu.memory_space<vmem>>, vector<2x128xf32>
    tpu.vector_store %arg12[%c0_17, %c0_18], %23 {strides = array<i32>} : memref<2x128xf32, #tpu.memory_space<vmem>>, vector<2x128xf32>,
    %c0_i32_19 = arith.constant 0 : i32
    %25 = arith.cmpi eq, %arg1, %c0_i32_19 : i32
    %26 = arith.extui %25 : i1 to i32
    %c0_i32_20 = arith.constant 0 : i32
    %27 = arith.cmpi ne, %26, %c0_i32_20 : i32
    scf.if %27 {
      %c0_21 = arith.constant 0 : index
      %c0_22 = arith.constant 0 : index
      %28 = vector.load %arg12[%c0_21, %c0_22] : memref<2x128xf32, #tpu.memory_space<vmem>>, vector<2x128xf32>
      %29 = arith.truncf %28 : vector<2x128xf32> to vector<2x128xbf16>
      %c0_23 = arith.constant 0 : index
      %c0_24 = arith.constant 0 : index
      %30 = vector.load %arg7[%c0_23, %c0_24] : memref<128x128xbf16, #tpu.memory_space<vmem>>, vector<128x128xbf16>
      %cst_25 = arith.constant dense<0.000000e+00> : vector<2x128xf32>
      %31 = tpu.matmul %29, %30, %cst_25 {dimension_numbers = #tpu.dot_dimension_numbers<[1], [0], [0], [1], [0, 0, 1, 1], [], []>} : vector<2x128xbf16>, vector<128x128xbf16>, vector<2x128xf32> -> vector<2x128xf32>
      %c0_26 = arith.constant 0 : index
      %c0_27 = arith.constant 0 : index
      %32 = vector.load %arg8[%c0_26, %c0_27] : memref<1x128xf32, #tpu.memory_space<vmem>>, vector<1x128xf32>
      %33 = vector.broadcast %32 : vector<1x128xf32> to vector<2x128xf32>
      %34 = arith.addf %31, %33 : vector<2x128xf32>
      %cst_28 = arith.constant 0.000000e+00 : f32
      %35 = vector.broadcast %cst_28 : f32 to vector<2x128xf32>
      %36 = arith.maximumf %34, %35 : vector<2x128xf32>
      %37 = arith.truncf %36 : vector<2x128xf32> to vector<2x128xbf16>
      %c0_29 = arith.constant 0 : index
      %c0_30 = arith.constant 0 : index
      %38 = vector.load %arg9[%c0_29, %c0_30] : memref<128x128xbf16, #tpu.memory_space<vmem>>, vector<128x128xbf16>
      %cst_31 = arith.constant dense<0.000000e+00> : vector<2x128xf32>
      %39 = tpu.matmul %37, %38, %cst_31 {dimension_numbers = #tpu.dot_dimension_numbers<[1], [0], [0], [1], [0, 0, 1, 1], [], []>} : vector<2x128xbf16>, vector<128x128xbf16>, vector<2x128xf32> -> vector<2x128xf32>
      %c0_32 = arith.constant 0 : index
      %c0_33 = arith.constant 0 : index
      %40 = vector.load %arg10[%c0_32, %c0_33] : memref<1x128xf32, #tpu.memory_space<vmem>>, vector<1x128xf32>
      %41 = vector.broadcast %40 : vector<1x128xf32> to vector<2x128xf32>
      %42 = arith.addf %39, %41 : vector<2x128xf32>
      %43 = arith.mulf %42, %42 : vector<2x128xf32>
      %cst_34 = arith.constant dense<0.000000e+00> : vector<2xf32>
      %44 = vector.multi_reduction <add>, %43, %cst_34 [1] : vector<2x128xf32> to vector<2xf32>
      %45 = vector.shape_cast %44 : vector<2xf32> to vector<2x1xf32>
      %cst_35 = arith.constant 1.000000e-24 : f32
      %46 = vector.broadcast %cst_35 : f32 to vector<2x1xf32>
      %47 = arith.maximumf %45, %46 : vector<2x1xf32>
      %48 = math.rsqrt %47 : vector<2x1xf32>
      %49 = vector.broadcast %48 : vector<2x1xf32> to vector<2x128xf32>
      %50 = arith.mulf %42, %49 : vector<2x128xf32>
      %c0_36 = arith.constant 0 : index
      %c0_37 = arith.constant 0 : index
      %51 = vector.load %arg11[%c0_36, %c0_37] : memref<2x128xf32, #tpu.memory_space<vmem>>, vector<2x128xf32>
      tpu.vector_store %arg11[%c0_36, %c0_37], %50 {strides = array<i32>} : memref<2x128xf32, #tpu.memory_space<vmem>>, vector<2x128xf32>,
    } else {
    }
    return
  }
  func.func @transform_0(%arg0: i32, %arg1: i32) -> (i32, i32, i32) {
    %c0_i32 = arith.constant 0 : i32
    %c0_i32_0 = arith.constant 0 : i32
    return %arg0, %arg1, %c0_i32 : i32, i32, i32
  }
  func.func @transform_1(%arg0: i32, %arg1: i32) -> (i32, i32) {
    %c0_i32 = arith.constant 0 : i32
    %c0_i32_0 = arith.constant 0 : i32
    %c0_i32_1 = arith.constant 0 : i32
    return %c0_i32, %c0_i32_0 : i32, i32
  }
  func.func @transform_2(%arg0: i32, %arg1: i32) -> (i32, i32) {
    %c0_i32 = arith.constant 0 : i32
    %c0_i32_0 = arith.constant 0 : i32
    %c0_i32_1 = arith.constant 0 : i32
    return %c0_i32, %c0_i32_0 : i32, i32
  }
  func.func @transform_3(%arg0: i32, %arg1: i32) -> (i32, i32) {
    %c0_i32 = arith.constant 0 : i32
    %c0_i32_0 = arith.constant 0 : i32
    %c0_i32_1 = arith.constant 0 : i32
    return %c0_i32, %c0_i32_0 : i32, i32
  }
  func.func @transform_4(%arg0: i32, %arg1: i32) -> (i32, i32) {
    %c0_i32 = arith.constant 0 : i32
    %c0_i32_0 = arith.constant 0 : i32
    %c0_i32_1 = arith.constant 0 : i32
    return %c0_i32, %c0_i32_0 : i32, i32
  }
  func.func @transform_5(%arg0: i32, %arg1: i32) -> (i32, i32) {
    %c0_i32 = arith.constant 0 : i32
    %c0_i32_0 = arith.constant 0 : i32
    %c0_i32_1 = arith.constant 0 : i32
    return %c0_i32, %c0_i32_0 : i32, i32
  }
  func.func @transform_6(%arg0: i32, %arg1: i32) -> (i32, i32) {
    %c0_i32 = arith.constant 0 : i32
    %c0_i32_0 = arith.constant 0 : i32
    %c0_i32_1 = arith.constant 0 : i32
    return %c0_i32, %c0_i32_0 : i32, i32
  }
  func.func @transform_7(%arg0: i32, %arg1: i32) -> (i32, i32) {
    %c0_i32 = arith.constant 0 : i32
    %c0_i32_0 = arith.constant 0 : i32
    %c0_i32_1 = arith.constant 0 : i32
    return %c0_i32, %c0_i32_0 : i32, i32
  }
  func.func @transform_8(%arg0: i32, %arg1: i32) -> (i32, i32) {
    %c0_i32 = arith.constant 0 : i32
    %c0_i32_0 = arith.constant 0 : i32
    %c0_i32_1 = arith.constant 0 : i32
    return %c0_i32, %c0_i32_0 : i32, i32
  }
  func.func @transform_9(%arg0: i32, %arg1: i32) -> (i32, i32) {
    %c0_i32 = arith.constant 0 : i32
    %c0_i32_0 = arith.constant 0 : i32
    return %arg0, %c0_i32 : i32, i32
  }
}

</mosaic_0001>

<llo_original>
// kernel: tpu_custom_call.1
$region0: #{tpu_custom_call.1}
  #allocation0 [shape = 'u32[]', space=smem, size = 0x4, offset = 0x4, fixed_abs, tag = 'smem constant byte address 0x4 - core index']
  #allocation1 [shape = 'u32[144,128]{1,0:T(1,128)}', space=vmem, size = 0x12000, scoped, tag = 'internal scratch']
  #allocation2 [shape = 'f32[2,128]{1,0:T(2,128)}', space=vmem, size = 0x400, scoped, tag = 'scratch operand']
  %s0 = inlined_call_operand.hbm [shape: bf16[2,8,8], index: 0, kind: input, shape index: {}]
  %s1 = inlined_call_operand.hbm [shape: bf16[8,128], index: 1, kind: input, shape index: {}]
  %s2 = inlined_call_operand.vmem [shape: f32[1,128], index: 2, kind: input, shape index: {}]
  %s3 = inlined_call_operand.hbm [shape: bf16[128,128], index: 3, kind: input, shape index: {}]
  %s4 = inlined_call_operand.vmem [shape: f32[1,128], index: 4, kind: input, shape index: {}]
  %s5 = inlined_call_operand.hbm [shape: bf16[128,128], index: 5, kind: input, shape index: {}]
  %s6 = inlined_call_operand.vmem [shape: f32[1,128], index: 6, kind: input, shape index: {}]
  %s7 = inlined_call_operand.hbm [shape: bf16[128,128], index: 7, kind: input, shape index: {}]
  %s8 = inlined_call_operand.vmem [shape: f32[1,128], index: 8, kind: input, shape index: {}]
  %s9 = inlined_call_operand.hbm [shape: f32[2,128], index: 9, kind: output, shape index: {}]
  %s10 = sld [smem:[#allocation0]]
  $region74: #{tpu_custom_call.1} parent=0
    _
  %s12 = ssub.s32 1, %s10
  %s13 = scalar_select 0, %s12, %s10
  $region1: #{tpu_custom_call.1} parent=0
    #allocation3 [shape = 'u8[4096]{0}', space=vmem, size = 0x1000, scoped, tag = 'input window, operand 0, single buffered']
    #allocation4 [shape = 's32[1]{0}', space=sflag, size = 0x4, scoped, tag = 'scoped memory for tpu_custom_call.1']
    #allocation5 [shape = 's32[1]{0}', space=sflag, size = 0x4, scoped, tag = 'scoped memory for tpu_custom_call.1']
    #allocation6 [shape = 'u8[2048]{0}', space=vmem, size = 0x800, scoped, tag = 'input window, operand 1, single buffered']
    #allocation7 [shape = 's32[1]{0}', space=sflag, size = 0x4, scoped, tag = 'scoped memory for tpu_custom_call.1']
    #allocation8 [shape = 'u8[32768]{0}', space=vmem, size = 0x8000, scoped, tag = 'input window, operand 3, single buffered']
    #allocation9 [shape = 'u8[32768]{0}', space=vmem, size = 0x8000, scoped, tag = 'input window, operand 5, single buffered']
    #allocation10 [shape = 's32[1]{0}', space=sflag, size = 0x4, scoped, tag = 'scoped memory for tpu_custom_call.1']
    #allocation11 [shape = 'u8[32768]{0}', space=vmem, size = 0x8000, scoped, tag = 'input window, operand 7, single buffered']
    #allocation12 [shape = 'u8[1024]{0}', space=vmem, size = 0x400, scoped, tag = 'output window, operand 0, single buffered']
    %14 = vsyncpa [#allocation4], 0
    %15 = vsyncpa [#allocation7], 0
    %16 = vsyncpa [#allocation10], 0
    %17 = vsyncpa [#allocation5], 0
    // Predicated region
    $region2: #{tpu_custom_call.1} parent=1 // pred_check
      _
    $region3: #{tpu_custom_call.1} parent=1 // pred_check_branch
      %19 = sbr.rel (0) target = $region5
    $region4: #{tpu_custom_call.1} parent=1 // pred_region
      %s21 = ssub.s32 128, 128
      %22 = vsyncadd [#allocation4], %s21
      %s23 = sshll.u32 [#allocation3], 4
      %s24 = int_to_ptr.vmem [resolvable:$true] %s23
      %29 = dma.hbm_to_vmem [thread:$0]  %s0, 128, %s24, [#allocation4], 64, 64, 4
    $region5: #{tpu_custom_call.1} parent=1 // pred_fallthru
      _
    // Predicated region
    $region6: #{tpu_custom_call.1} parent=1 // pred_check
      _
    $region7: #{tpu_custom_call.1} parent=1 // pred_check_branch
      %31 = sbr.rel (0) target = $region9
    $region8: #{tpu_custom_call.1} parent=1 // pred_region
      %s33 = ssub.s32 64, 64
      %34 = vsyncadd [#allocation7], %s33
      %s36 = sshll.u32 [#allocation6], 4
      %s37 = int_to_ptr.vmem [resolvable:$true] %s36
      %39 = dma.hbm_to_vmem [thread:$0]  %s1, 64, %s37, [#allocation7]
    $region9: #{tpu_custom_call.1} parent=1 // pred_fallthru
      _
    // Predicated region
    $region10: #{tpu_custom_call.1} parent=1 // pred_check
      _
    $region11: #{tpu_custom_call.1} parent=1 // pred_check_branch
      %41 = sbr.rel (0) target = $region13
    $region12: #{tpu_custom_call.1} parent=1 // pred_region
      _
    $region13: #{tpu_custom_call.1} parent=1 // pred_fallthru
      _
    // Predicated region
    $region14: #{tpu_custom_call.1} parent=1 // pred_check
      _
    $region15: #{tpu_custom_call.1} parent=1 // pred_check_branch
      %43 = sbr.rel (0) target = $region17
    $region16: #{tpu_custom_call.1} parent=1 // pred_region
      %s45 = ssub.s32 1024, 1024
      %46 = vsyncadd [#allocation7], %s45
      %s47 = sshll.u32 [#allocation8], 4
      %s48 = int_to_ptr.vmem [resolvable:$true] %s47
      %53 = dma.hbm_to_vmem [thread:$0]  %s3, 1024, %s48, [#allocation7], 64, 64, 4
    $region17: #{tpu_custom_call.1} parent=1 // pred_fallthru
      _
    // Predicated region
    $region18: #{tpu_custom_call.1} parent=1 // pred_check
      _
    $region19: #{tpu_custom_call.1} parent=1 // pred_check_branch
      %55 = sbr.rel (0) target = $region21
    $region20: #{tpu_custom_call.1} parent=1 // pred_region
      _
    $region21: #{tpu_custom_call.1} parent=1 // pred_fallthru
      _
    // Predicated region
    $region22: #{tpu_custom_call.1} parent=1 // pred_check
      _
    $region23: #{tpu_custom_call.1} parent=1 // pred_check_branch
      %57 = sbr.rel (0) target = $region25
    $region24: #{tpu_custom_call.1} parent=1 // pred_region
      %s59 = ssub.s32 1024, 1024
      %60 = vsyncadd [#allocation10], %s59
      %s61 = sshll.u32 [#allocation9], 4
      %s62 = int_to_ptr.vmem [resolvable:$true] %s61
      %67 = dma.hbm_to_vmem [thread:$0]  %s5, 1024, %s62, [#allocation10], 64, 64, 4
    $region25: #{tpu_custom_call.1} parent=1 // pred_fallthru
      _
    // Predicated region
    $region26: #{tpu_custom_call.1} parent=1 // pred_check
      _
    $region27: #{tpu_custom_call.1} parent=1 // pred_check_branch
      %69 = sbr.rel (0) target = $region29
    $region28: #{tpu_custom_call.1} parent=1 // pred_region
      _
    $region29: #{tpu_custom_call.1} parent=1 // pred_fallthru
      _
    // Predicated region
    $region30: #{tpu_custom_call.1} parent=1 // pred_check
      _
    $region31: #{tpu_custom_call.1} parent=1 // pred_check_branch
      %71 = sbr.rel (0) target = $region33
    $region32: #{tpu_custom_call.1} parent=1 // pred_region
      %s73 = ssub.s32 1024, 1024
      %74 = vsyncadd [#allocation10], %s73
      %s75 = sshll.u32 [#allocation11], 4
      %s76 = int_to_ptr.vmem [resolvable:$true] %s75
      %81 = dma.hbm_to_vmem [thread:$0]  %s7, 1024, %s76, [#allocation10], 64, 64, 4
    $region33: #{tpu_custom_call.1} parent=1 // pred_fallthru
      _
    // Predicated region
    $region34: #{tpu_custom_call.1} parent=1 // pred_check
      _
    $region35: #{tpu_custom_call.1} parent=1 // pred_check_branch
      %83 = sbr.rel (0) target = $region37
    $region36: #{tpu_custom_call.1} parent=1 // pred_region
      _
    $region37: #{tpu_custom_call.1} parent=1 // pred_fallthru
      _
    // Predicated region
    $region38: #{tpu_custom_call.1} parent=1 // pred_check
      _
    $region39: #{tpu_custom_call.1} parent=1 // pred_check_branch
      %85 = sbr.rel (0) target = $region41
    $region40: #{tpu_custom_call.1} parent=1 // pred_region
      %86 = dma.done [#allocation4], 128
    $region41: #{tpu_custom_call.1} parent=1 // pred_fallthru
      _
    // Predicated region
    $region42: #{tpu_custom_call.1} parent=1 // pred_check
      _
    $region43: #{tpu_custom_call.1} parent=1 // pred_check_branch
      %88 = sbr.rel (0) target = $region45
    $region44: #{tpu_custom_call.1} parent=1 // pred_region
      %89 = dma.done [#allocation7], 64
    $region45: #{tpu_custom_call.1} parent=1 // pred_fallthru
      _
    // Predicated region
    $region46: #{tpu_custom_call.1} parent=1 // pred_check
      _
    $region47: #{tpu_custom_call.1} parent=1 // pred_check_branch
      %91 = sbr.rel (0) target = $region49
    $region48: #{tpu_custom_call.1} parent=1 // pred_region
      %92 = dma.done [#allocation7], 1024
    $region49: #{tpu_custom_call.1} parent=1 // pred_fallthru
      _
    // Predicated region
    $region50: #{tpu_custom_call.1} parent=1 // pred_check
      _
    $region51: #{tpu_custom_call.1} parent=1 // pred_check_branch
      %94 = sbr.rel (0) target = $region53
    $region52: #{tpu_custom_call.1} parent=1 // pred_region
      %95 = dma.done [#allocation10], 1024
    $region53: #{tpu_custom_call.1} parent=1 // pred_fallthru
      _
    // Predicated region
    $region54: #{tpu_custom_call.1} parent=1 // pred_check
      _
    $region55: #{tpu_custom_call.1} parent=1 // pred_check_branch
      %97 = sbr.rel (0) target = $region57
    $region56: #{tpu_custom_call.1} parent=1 // pred_region
      %98 = dma.done [#allocation10], 1024
    $region57: #{tpu_custom_call.1} parent=1 // pred_fallthru
      _
    %p100 = scmp.eq.s32.totalorder 0, 0
    // Predicated region
    $region58: #{tpu_custom_call.1} parent=1 // pred_check
      %p101 = pneg %p100
    $region59: #{tpu_custom_call.1} parent=1 // pred_check_branch
      %103 = sbr.rel (%p101) target = $region61
    $region60: #{tpu_custom_call.1} parent=1 // pred_region
      %104 = vst [vmem:[#allocation2] sm:$0x3] 0.0
    $region61: #{tpu_custom_call.1} parent=1 // pred_fallthru
      _
    %v105 = vld [vmem:[#allocation3] sm:$0xf]
    %v106 = vld [vmem:[#allocation3 + $0x4] sm:$0xf]
    %v107 = vld [vmem:[#allocation6] sm:$0xf]
    %v108 = vld [vmem:[%s2] sm:$0x1]
    %v110 = vlaneseq
    %v111 = vshrl.u32 %v110, 7
    %v112 = vsub.s32 0, %v111
    %v113 = vrot.slane %v108, %v112
    %v117 = vunpack.c.l.b16 %v105
    %v118 = vunpack.c.l.b16 %v106
    %v119 = vpack.c.b16 %v118, %v117
    %vm120 = vcmask 64512
    %v122 = vsel %vm120, %v119, 0
    %vm124 = vcmask 1043456
    %v126 = vsel %vm124, %v107, 0
    %128 = vmatprep.subr.bf16.mxu0 0
    %129 = vmatpush1.bf16.msra.mxu0 %v126
    %130 = vmatprep.subr.bf16.mxu0 0
    %131 = vmatpush1.bf16.msra.mxu0 0
    %132 = vmatprep.subr.bf16.mxu0 0
    %133 = vmatpush1.bf16.msra.mxu0 0
    %134 = vmatprep.subr.bf16.mxu0 0
    %135 = vmatpush1.bf16.msra.mxu0 0
    %136 = vmatprep.subr.bf16.mxu0 0
    %137 = vmatpush1.bf16.msra.mxu0 0
    %138 = vmatprep.subr.bf16.mxu0 0
    %139 = vmatpush1.bf16.msra.mxu0 0
    %140 = vmatprep.subr.bf16.mxu0 0
    %141 = vmatpush1.bf16.msra.mxu0 0
    %142 = vmatprep.subr.bf16.mxu0 0
    %143 = vmatpush1.bf16.msra.mxu0 0
    %144 = vmatprep.subr.bf16.mxu0 0
    %145 = vmatpush1.bf16.msra.mxu0 0
    %146 = vmatprep.subr.bf16.mxu0 0
    %147 = vmatpush1.bf16.msra.mxu0 0
    %148 = vmatprep.subr.bf16.mxu0 0
    %149 = vmatpush1.bf16.msra.mxu0 0
    %150 = vmatprep.subr.bf16.mxu0 0
    %151 = vmatpush1.bf16.msra.mxu0 0
    %152 = vmatprep.subr.bf16.mxu0 0
    %153 = vmatpush1.bf16.msra.mxu0 0
    %154 = vmatprep.subr.bf16.mxu0 0
    %155 = vmatpush1.bf16.msra.mxu0 0
    %156 = vmatprep.subr.bf16.mxu0 0
    %157 = vmatpush1.bf16.msra.mxu0 0
    %158 = vmatprep.subr.bf16.mxu0 0
    %159 = vmatpush1.bf16.msra.mxu0 0
    %160 = vmatprep.mubr.bf16.mxu0 0
    %161 = vmatmul.mubr.bf16.gmra.mrb[0].mxu0 %v122
    %v162 = vpop.f32.mrb[0].mxu0
    %v163 = vadd.f32 %v113, %v162
    %v164 = vpop.f32.mrb[0].mxu0
    %v165 = vpop.f32.mrb[0].mxu0
    %v166 = vadd.f32 %v113, %v165
    %v167 = vpop.f32.mrb[0].mxu0
    %168 = vdwg.mxu0
    %v169 = vmax.f32 %v163, 0.0
    %v170 = vmax.f32 %v166, 0.0
    %v171 = vpack.c.bf16 %v170, %v169
    %v172 = vld [vmem:[#allocation8] sm:$0xf]
    %v173 = vld [vmem:[#allocation8 + $0x4] sm:$0xf]
    %v174 = vld [vmem:[#allocation8 + $0x8] sm:$0xf]
    %v175 = vld [vmem:[#allocation8 + $0xc] sm:$0xf]
    %v176 = vld [vmem:[#allocation8 + $0x10] sm:$0xf]
    %v177 = vld [vmem:[#allocation8 + $0x14] sm:$0xf]
    %v178 = vld [vmem:[#allocation8 + $0x18] sm:$0xf]
    %v179 = vld [vmem:[#allocation8 + $0x1c] sm:$0xf]
    %v180 = vld [vmem:[#allocation8 + $0x20] sm:$0xf]
    %v181 = vld [vmem:[#allocation8 + $0x24] sm:$0xf]
    %v182 = vld [vmem:[#allocation8 + $0x28] sm:$0xf]
    %v183 = vld [vmem:[#allocation8 + $0x2c] sm:$0xf]
    %v184 = vld [vmem:[#allocation8 + $0x30] sm:$0xf]
    %v185 = vld [vmem:[#allocation8 + $0x34] sm:$0xf]
    %v186 = vld [vmem:[#allocation8 + $0x38] sm:$0xf]
    %v187 = vld [vmem:[#allocation8 + $0x3c] sm:$0xf]
    %v188 = vld [vmem:[%s4] sm:$0x1]
    %v190 = vlaneseq
    %v191 = vshrl.u32 %v190, 7
    %v192 = vsub.s32 0, %v191
    %v193 = vrot.slane %v188, %v192
    %v211 = vunpack.c.l.b16 %v172
    %v212 = vunpack.c.l.b16 %v173
    %v213 = vunpack.c.l.b16 %v174
    %v214 = vunpack.c.l.b16 %v175
    %v215 = vunpack.c.l.b16 %v176
    %v216 = vunpack.c.l.b16 %v177
    %v217 = vunpack.c.l.b16 %v178
    %v218 = vunpack.c.l.b16 %v179
    %v219 = vunpack.c.l.b16 %v180
    %v220 = vunpack.c.l.b16 %v181
    %v221 = vunpack.c.l.b16 %v182
    %v222 = vunpack.c.l.b16 %v183
    %v223 = vunpack.c.l.b16 %v184
    %v224 = vunpack.c.l.b16 %v185
    %v225 = vunpack.c.l.b16 %v186
    %v226 = vunpack.c.l.b16 %v187
    %v227 = vpack.c.b16 %v212, %v211
    %v228 = vpack.c.b16 %v214, %v213
    %v229 = vpack.c.b16 %v216, %v215
    %v230 = vpack.c.b16 %v218, %v217
    %v231 = vpack.c.b16 %v220, %v219
    %v232 = vpack.c.b16 %v222, %v221
    %v233 = vpack.c.b16 %v224, %v223
    %v234 = vpack.c.b16 %v226, %v225
    %243 = vmatprep.subr.bf16.mxu0 0
    %244 = vmatpush1.bf16.msra.mxu0 %v227
    %245 = vmatprep.subr.bf16.mxu0 0
    %246 = vmatpush1.bf16.msra.mxu0 %v228
    %247 = vmatprep.subr.bf16.mxu0 0
    %248 = vmatpush1.bf16.msra.mxu0 %v229
    %249 = vmatprep.subr.bf16.mxu0 0
    %250 = vmatpush1.bf16.msra.mxu0 %v230
    %251 = vmatprep.subr.bf16.mxu0 0
    %252 = vmatpush1.bf16.msra.mxu0 %v231
    %253 = vmatprep.subr.bf16.mxu0 0
    %254 = vmatpush1.bf16.msra.mxu0 %v232
    %255 = vmatprep.subr.bf16.mxu0 0
    %256 = vmatpush1.bf16.msra.mxu0 %v233
    %257 = vmatprep.subr.bf16.mxu0 0
    %258 = vmatpush1.bf16.msra.mxu0 %v234
    %259 = vmatprep.subr.bf16.mxu0 0
    %260 = vmatpush1.bf16.msra.mxu0 0
    %261 = vmatprep.subr.bf16.mxu0 0
    %262 = vmatpush1.bf16.msra.mxu0 0
    %263 = vmatprep.subr.bf16.mxu0 0
    %264 = vmatpush1.bf16.msra.mxu0 0
    %265 = vmatprep.subr.bf16.mxu0 0
    %266 = vmatpush1.bf16.msra.mxu0 0
    %267 = vmatprep.subr.bf16.mxu0 0
    %268 = vmatpush1.bf16.msra.mxu0 0
    %269 = vmatprep.subr.bf16.mxu0 0
    %270 = vmatpush1.bf16.msra.mxu0 0
    %271 = vmatprep.subr.bf16.mxu0 0
    %272 = vmatpush1.bf16.msra.mxu0 0
    %273 = vmatprep.subr.bf16.mxu0 0
    %274 = vmatpush1.bf16.msra.mxu0 0
    %275 = vmatprep.mubr.bf16.mxu0 0
    %276 = vmatmul.mubr.bf16.gmra.mrb[0].mxu0 %v171
    %v277 = vpop.f32.mrb[0].mxu0
    %v278 = vadd.f32 %v193, %v277
    %v279 = vpop.f32.mrb[0].mxu0
    %v280 = vpop.f32.mrb[0].mxu0
    %v281 = vadd.f32 %v193, %v280
    %v282 = vpop.f32.mrb[0].mxu0
    %283 = vdwg.mxu0
    %v284 = vmax.f32 %v278, 0.0
    %v285 = vmax.f32 %v281, 0.0
    %v286 = vld [vmem:[#allocation2] sm:$0x3]
    %v287 = vrot.slane %v284, 4
    %v288 = vadd.f32 %v284, %v287
    %v289 = vrot.slane %v288, 2
    %v290 = vadd.f32 %v288, %v289
    %v291 = vrot.slane %v290, 1
    %v292 = vadd.f32 %v290, %v291
    %v293 = vrot.slane %v285, 4
    %v294 = vadd.f32 %v285, %v293
    %v295 = vrot.slane %v294, 2
    %v296 = vadd.f32 %v294, %v295
    %v297 = vrot.slane %v296, 1
    %v298 = vadd.f32 %v296, %v297
    %vm301 = vcmask 1041409
    %v302 = vsel %vm301, %v298, %v292
    %v304 = vadd.f32 %v286, %v302
    %305 = vst [vmem:[#allocation2] sm:$0x3] %v304
    // Predicated region
    $region62: #{tpu_custom_call.1} parent=1 // pred_check
      %p306 = pneg %p100
    $region63: #{tpu_custom_call.1} parent=1 // pred_check_branch
      %308 = sbr.rel (%p306) target = $region65
    $region64: #{tpu_custom_call.1} parent=1 // pred_region
      %v309 = vld [vmem:[#allocation2] sm:$0x3]
      %v310 = vpack.c.bf16 %v309, %v309
      %v311 = vld [vmem:[#allocation9] sm:$0xf]
      %v312 = vld [vmem:[#allocation9 + $0x4] sm:$0xf]
      %v313 = vld [vmem:[#allocation9 + $0x8] sm:$0xf]
      %v314 = vld [vmem:[#allocation9 + $0xc] sm:$0xf]
      %v315 = vld [vmem:[#allocation9 + $0x10] sm:$0xf]
      %v316 = vld [vmem:[#allocation9 + $0x14] sm:$0xf]
      %v317 = vld [vmem:[#allocation9 + $0x18] sm:$0xf]
      %v318 = vld [vmem:[#allocation9 + $0x1c] sm:$0xf]
      %v319 = vld [vmem:[#allocation9 + $0x20] sm:$0xf]
      %v320 = vld [vmem:[#allocation9 + $0x24] sm:$0xf]
      %v321 = vld [vmem:[#allocation9 + $0x28] sm:$0xf]
      %v322 = vld [vmem:[#allocation9 + $0x2c] sm:$0xf]
      %v323 = vld [vmem:[#allocation9 + $0x30] sm:$0xf]
      %v324 = vld [vmem:[#allocation9 + $0x34] sm:$0xf]
      %v325 = vld [vmem:[#allocation9 + $0x38] sm:$0xf]
      %v326 = vld [vmem:[#allocation9 + $0x3c] sm:$0xf]
      %v327 = vld [vmem:[%s6] sm:$0x1]
      %v329 = vlaneseq
      %v330 = vshrl.u32 %v329, 7
      %v331 = vsub.s32 0, %v330
      %v332 = vrot.slane %v327, %v331
      %v350 = vunpack.c.l.b16 %v311
      %v351 = vunpack.c.l.b16 %v312
      %v352 = vunpack.c.l.b16 %v313
      %v353 = vunpack.c.l.b16 %v314
      %v354 = vunpack.c.l.b16 %v315
      %v355 = vunpack.c.l.b16 %v316
      %v356 = vunpack.c.l.b16 %v317
      %v357 = vunpack.c.l.b16 %v318
      %v358 = vunpack.c.l.b16 %v319
      %v359 = vunpack.c.l.b16 %v320
      %v360 = vunpack.c.l.b16 %v321
      %v361 = vunpack.c.l.b16 %v322
      %v362 = vunpack.c.l.b16 %v323
      %v363 = vunpack.c.l.b16 %v324
      %v364 = vunpack.c.l.b16 %v325
      %v365 = vunpack.c.l.b16 %v326
      %v366 = vpack.c.b16 %v351, %v350
      %v367 = vpack.c.b16 %v353, %v352
      %v368 = vpack.c.b16 %v355, %v354
      %v369 = vpack.c.b16 %v357, %v356
      %v370 = vpack.c.b16 %v359, %v358
      %v371 = vpack.c.b16 %v361, %v360
      %v372 = vpack.c.b16 %v363, %v362
      %v373 = vpack.c.b16 %v365, %v364
      %382 = vmatprep.subr.bf16.mxu0 0
      %383 = vmatpush1.bf16.msra.mxu0 %v366
      %384 = vmatprep.subr.bf16.mxu0 0
      %385 = vmatpush1.bf16.msra.mxu0 %v367
      %386 = vmatprep.subr.bf16.mxu0 0
      %387 = vmatpush1.bf16.msra.mxu0 %v368
      %388 = vmatprep.subr.bf16.mxu0 0
      %389 = vmatpush1.bf16.msra.mxu0 %v369
      %390 = vmatprep.subr.bf16.mxu0 0
      %391 = vmatpush1.bf16.msra.mxu0 %v370
      %392 = vmatprep.subr.bf16.mxu0 0
      %393 = vmatpush1.bf16.msra.mxu0 %v371
      %394 = vmatprep.subr.bf16.mxu0 0
      %395 = vmatpush1.bf16.msra.mxu0 %v372
      %396 = vmatprep.subr.bf16.mxu0 0
      %397 = vmatpush1.bf16.msra.mxu0 %v373
      %398 = vmatprep.subr.bf16.mxu0 0
      %399 = vmatpush1.bf16.msra.mxu0 0
      %400 = vmatprep.subr.bf16.mxu0 0
      %401 = vmatpush1.bf16.msra.mxu0 0
      %402 = vmatprep.subr.bf16.mxu0 0
      %403 = vmatpush1.bf16.msra.mxu0 0
      %404 = vmatprep.subr.bf16.mxu0 0
      %405 = vmatpush1.bf16.msra.mxu0 0
      %406 = vmatprep.subr.bf16.mxu0 0
      %407 = vmatpush1.bf16.msra.mxu0 0
      %408 = vmatprep.subr.bf16.mxu0 0
      %409 = vmatpush1.bf16.msra.mxu0 0
      %410 = vmatprep.subr.bf16.mxu0 0
      %411 = vmatpush1.bf16.msra.mxu0 0
      %412 = vmatprep.subr.bf16.mxu0 0
      %413 = vmatpush1.bf16.msra.mxu0 0
      %414 = vmatprep.mubr.bf16.mxu0 0
      %415 = vmatmul.mubr.bf16.gmra.mrb[0].mxu0 %v310
      %v416 = vpop.f32.mrb[0].mxu0
      %v417 = vadd.f32 %v332, %v416
      %v418 = vpop.f32.mrb[0].mxu0
      %v419 = vpop.f32.mrb[0].mxu0
      %v420 = vpop.f32.mrb[0].mxu0
      %421 = vdwg.mxu0
      %v422 = vmax.f32 %v417, 0.0
      %v423 = vpack.c.bf16 %v422, %v422
      %v424 = vld [vmem:[#allocation11] sm:$0xf]
      %v425 = vld [vmem:[#allocation11 + $0x4] sm:$0xf]
      %v426 = vld [vmem:[#allocation11 + $0x8] sm:$0xf]
      %v427 = vld [vmem:[#allocation11 + $0xc] sm:$0xf]
      %v428 = vld [vmem:[#allocation11 + $0x10] sm:$0xf]
      %v429 = vld [vmem:[#allocation11 + $0x14] sm:$0xf]
      %v430 = vld [vmem:[#allocation11 + $0x18] sm:$0xf]
      %v431 = vld [vmem:[#allocation11 + $0x1c] sm:$0xf]
      %v432 = vld [vmem:[#allocation11 + $0x20] sm:$0xf]
      %v433 = vld [vmem:[#allocation11 + $0x24] sm:$0xf]
      %v434 = vld [vmem:[#allocation11 + $0x28] sm:$0xf]
      %v435 = vld [vmem:[#allocation11 + $0x2c] sm:$0xf]
      %v436 = vld [vmem:[#allocation11 + $0x30] sm:$0xf]
      %v437 = vld [vmem:[#allocation11 + $0x34] sm:$0xf]
      %v438 = vld [vmem:[#allocation11 + $0x38] sm:$0xf]
      %v439 = vld [vmem:[#allocation11 + $0x3c] sm:$0xf]
      %v440 = vld [vmem:[%s8] sm:$0x1]
      %v442 = vlaneseq
      %v443 = vshrl.u32 %v442, 7
      %v444 = vsub.s32 0, %v443
      %v445 = vrot.slane %v440, %v444
      %v463 = vunpack.c.l.b16 %v424
      %v464 = vunpack.c.l.b16 %v425
      %v465 = vunpack.c.l.b16 %v426
      %v466 = vunpack.c.l.b16 %v427
      %v467 = vunpack.c.l.b16 %v428
      %v468 = vunpack.c.l.b16 %v429
      %v469 = vunpack.c.l.b16 %v430
      %v470 = vunpack.c.l.b16 %v431
      %v471 = vunpack.c.l.b16 %v432
      %v472 = vunpack.c.l.b16 %v433
      %v473 = vunpack.c.l.b16 %v434
      %v474 = vunpack.c.l.b16 %v435
      %v475 = vunpack.c.l.b16 %v436
      %v476 = vunpack.c.l.b16 %v437
      %v477 = vunpack.c.l.b16 %v438
      %v478 = vunpack.c.l.b16 %v439
      %v479 = vpack.c.b16 %v464, %v463
      %v480 = vpack.c.b16 %v466, %v465
      %v481 = vpack.c.b16 %v468, %v467
      %v482 = vpack.c.b16 %v470, %v469
      %v483 = vpack.c.b16 %v472, %v471
      %v484 = vpack.c.b16 %v474, %v473
      %v485 = vpack.c.b16 %v476, %v475
      %v486 = vpack.c.b16 %v478, %v477
      %495 = vmatprep.subr.bf16.mxu0 0
      %496 = vmatpush1.bf16.msra.mxu0 %v479
      %497 = vmatprep.subr.bf16.mxu0 0
      %498 = vmatpush1.bf16.msra.mxu0 %v480
      %499 = vmatprep.subr.bf16.mxu0 0
      %500 = vmatpush1.bf16.msra.mxu0 %v481
      %501 = vmatprep.subr.bf16.mxu0 0
      %502 = vmatpush1.bf16.msra.mxu0 %v482
      %503 = vmatprep.subr.bf16.mxu0 0
      %504 = vmatpush1.bf16.msra.mxu0 %v483
      %505 = vmatprep.subr.bf16.mxu0 0
      %506 = vmatpush1.bf16.msra.mxu0 %v484
      %507 = vmatprep.subr.bf16.mxu0 0
      %508 = vmatpush1.bf16.msra.mxu0 %v485
      %509 = vmatprep.subr.bf16.mxu0 0
      %510 = vmatpush1.bf16.msra.mxu0 %v486
      %511 = vmatprep.subr.bf16.mxu0 0
      %512 = vmatpush1.bf16.msra.mxu0 0
      %513 = vmatprep.subr.bf16.mxu0 0
      %514 = vmatpush1.bf16.msra.mxu0 0
      %515 = vmatprep.subr.bf16.mxu0 0
      %516 = vmatpush1.bf16.msra.mxu0 0
      %517 = vmatprep.subr.bf16.mxu0 0
      %518 = vmatpush1.bf16.msra.mxu0 0
      %519 = vmatprep.subr.bf16.mxu0 0
      %520 = vmatpush1.bf16.msra.mxu0 0
      %521 = vmatprep.subr.bf16.mxu0 0
      %522 = vmatpush1.bf16.msra.mxu0 0
      %523 = vmatprep.subr.bf16.mxu0 0
      %524 = vmatpush1.bf16.msra.mxu0 0
      %525 = vmatprep.subr.bf16.mxu0 0
      %526 = vmatpush1.bf16.msra.mxu0 0
      %527 = vmatprep.mubr.bf16.mxu0 0
      %528 = vmatmul.mubr.bf16.gmra.mrb[0].mxu0 %v423
      %v529 = vpop.f32.mrb[0].mxu0
      %v530 = vadd.f32 %v445, %v529
      %v531 = vpop.f32.mrb[0].mxu0
      %v532 = vpop.f32.mrb[0].mxu0
      %v533 = vpop.f32.mrb[0].mxu0
      %534 = vdwg.mxu0
      %v535 = vmul.f32 %v530, %v530
      %vm536 = vcmask 1041408
      %v537 = vsel %vm536, %v535, 0.0
      %538 = vadd.xlane.f32.xlu0 %v537
      %v539 = vpop.xlane.xlu0 %538
      %v540 = vmax.f32 %v539, 1e-24
      %v541 = vrsqrt.pop %v540
      %v542 = vmul.f32 %v530, %v541
      %543 = vst [vmem:[#allocation12] sm:$0x3] %v542
    $region65: #{tpu_custom_call.1} parent=1 // pred_fallthru
      _
    // Predicated region
    $region66: #{tpu_custom_call.1} parent=1 // pred_check
      _
    $region67: #{tpu_custom_call.1} parent=1 // pred_check_branch
      %545 = sbr.rel (0) target = $region69
    $region68: #{tpu_custom_call.1} parent=1 // pred_region
      %s547 = ssub.s32 32, 32
      %548 = vsyncadd [#allocation5], %s547
      %s550 = sshll.u32 [#allocation12], 4
      %s551 = int_to_ptr.vmem [resolvable:$true] %s550
      %553 = dma.vmem_to_hbm [thread:$0]  %s551, 32, %s9, [#allocation5]
    $region69: #{tpu_custom_call.1} parent=1 // pred_fallthru
      _
    // Predicated region
    $region70: #{tpu_custom_call.1} parent=1 // pred_check
      _
    $region71: #{tpu_custom_call.1} parent=1 // pred_check_branch
      %555 = sbr.rel (0) target = $region73
    $region72: #{tpu_custom_call.1} parent=1 // pred_region
      %556 = dma.done [#allocation5], 32
    $region73: #{tpu_custom_call.1} parent=1 // pred_fallthru
      _
    %557 = vsyncpa [#allocation4], 1
    %558 = vsyncpa [#allocation7], 1
    %559 = vsyncpa [#allocation10], 1
    %560 = vsyncpa [#allocation5], 1

</llo_original>
